<compile_context>
chip_gen: v7x
topology: tpu7x:2x2x1
jax: 0.10.0
libtpu: 0.0.40
codegen_flags: <defaults>
</compile_context>

<pallas_src>
import math
import functools

import jax
import jax.numpy as jnp
from jax import lax
from jax.experimental import pallas as pl
from jax.experimental.pallas import tpu as pltpu


def _mha_kernel(*refs, has_mask, cache_kv, compute_dtype):
    # Ref order: q, k, v, [mask], wq, bq, wk, bk, wv, bv, wo, bo, out,
    #            acc, [k_cache, v_cache]
    it = iter(refs)
    q_ref = next(it)
    k_ref = next(it)
    v_ref = next(it)
    mask_ref = next(it) if has_mask else None
    wq_ref = next(it); bq_ref = next(it)
    wk_ref = next(it); bk_ref = next(it)
    wv_ref = next(it); bv_ref = next(it)
    wo_ref = next(it); bo_ref = next(it)
    out_ref = next(it)
    acc_ref = next(it)
    kc_ref = vc_ref = None
    if cache_kv:
        kc_ref = next(it)
        vc_ref = next(it)

    qi = pl.program_id(1)
    h = pl.program_id(2)
    cdt = compute_dtype

    # ---- Q projection for this head (1/sqrt(hd) already folded into wq/bq). ----
    q_in = q_ref[0]                                             # (bq, D), cdt
    qh = (jnp.dot(q_in, wq_ref[h], preferred_element_type=jnp.float32)
          + bq_ref[h].astype(jnp.float32)).astype(cdt)          # (bq, hd)

    # ---- K/V projections: computed once per (batch, head), cached over qi. ----
    def project_kv():
        kh = (jnp.dot(k_ref[0], wk_ref[h], preferred_element_type=jnp.float32)
              + bk_ref[h].astype(jnp.float32)).astype(cdt)      # (Sk, hd)
        vh = (jnp.dot(v_ref[0], wv_ref[h], preferred_element_type=jnp.float32)
              + bv_ref[h].astype(jnp.float32)).astype(cdt)      # (Sk, hd)
        return kh, vh

    if cache_kv:
        @pl.when(qi == 0)
        def _():
            kh0, vh0 = project_kv()
            kc_ref[h] = kh0
            vc_ref[h] = vh0
        kh = kc_ref[h]
        vh = vc_ref[h]
    else:
        kh, vh = project_kv()

    # ---- scores = Q . K^T (contract head_dim of both; no explicit transpose). ----
    scores = lax.dot_general(
        qh, kh, dimension_numbers=(((1,), (1,)), ((), ())),
        preferred_element_type=jnp.float32)                     # (bq, Sk) f32

    if has_mask:
        # Fill semantics, identical to masked_fill(mask == 0, -1e9).
        scores = jnp.where(mask_ref[0] == 0, jnp.float32(-1e9), scores)

    # ---- Softmax in f32; normalization deferred to after the PV matmul. ----
    scores = scores - jnp.max(scores, axis=-1, keepdims=True)
    p = jnp.exp(scores)                                         # (bq, Sk)
    l = jnp.sum(p, axis=-1, keepdims=True)                      # (bq, 1)

    head_out = jnp.dot(p.astype(cdt), vh,
                       preferred_element_type=jnp.float32)      # (bq, hd)
    head_out = head_out * pl.reciprocal(l, approx=True)         # cheap: (bq, hd)

    # ---- Per-head slice of the output projection, accumulated in f32. ----
    contrib = jnp.dot(head_out.astype(cdt), wo_ref[h],
                      preferred_element_type=jnp.float32)       # (bq, D)

    @pl.when(h == 0)
    def _():
        acc_ref[...] = jnp.zeros_like(acc_ref)

    acc_ref[...] += contrib

    @pl.when(h == pl.num_programs(2) - 1)
    def _():
        out_ref[0] = (acc_ref[...] + bo_ref[...]).astype(out_ref.dtype)


def _default_vmem_limit_bytes():
    try:
        cap = getattr(pltpu.get_tpu_info(), "vmem_capacity_bytes", None)
        if cap:
            return int(cap) * 3 // 4
    except Exception:
        pass
    return 48 * 1024 * 1024


def multi_head_attention(q, k, v, params, num_heads, mask=None,
                         block_q=None, matmul_dtype=None):
    """Pallas MHA forward matching the PyTorch module.

    q: [B, Sq, D], k/v: [B, Sk, D], mask: [B, 1, Sq, Sk] or None (0 => masked).
    matmul_dtype: MXU operand dtype. Defaults to bf16 for f32 inputs (f32
    accumulation is always used); pass jnp.float32 for exact-precision matmuls.
    """
    B, Sq, D = q.shape
    Sk = k.shape[1]
    hd = D // num_heads
    assert hd * num_heads == D, "d_model must be divisible by num_heads"

    if matmul_dtype is not None:
        cdt = jnp.dtype(matmul_dtype)
    elif q.dtype == jnp.float32:
        cdt = jnp.dtype(jnp.bfloat16)
    else:
        cdt = q.dtype
    out_dtype = q.dtype

    # ---- q-tile size: cap at 256 rows, keep it a multiple of 8, pad Sq. ----
    if block_q is None:
        block_q = 256
    if block_q >= Sq:
        block_q = Sq
    else:
        block_q = max(8, (block_q // 8) * 8)
    n_q = -(-Sq // block_q)
    Sq_pad = n_q * block_q

    scale = 1.0 / math.sqrt(hd)

    # PyTorch Linear stores W as (out, in); the kernel computes x @ W^T.
    # Split W^T's output columns per head -> (H, D, hd), cast to compute dtype.
    def per_head_cols(w, s=1.0):
        wt = jnp.transpose(w.T.reshape(D, num_heads, hd), (1, 0, 2))
        return (wt * s).astype(cdt)

    wq3 = per_head_cols(params["wq"], scale)          # fold 1/sqrt(hd) into Wq
    wk3 = per_head_cols(params["wk"])
    wv3 = per_head_cols(params["wv"])
    bq3 = (params["bq"] * scale).reshape(num_heads, 1, hd).astype(cdt)
    bk3 = params["bk"].reshape(num_heads, 1, hd).astype(cdt)
    bv3 = params["bv"].reshape(num_heads, 1, hd).astype(cdt)
    # Output projection: concat_h(head_h) @ Wo^T + bo == sum_h head_h @ Wo^T[h] + bo
    wo3 = params["wo"].T.reshape(num_heads, hd, D).astype(cdt)
    bo2 = params["bo"].reshape(1, D).astype(jnp.float32)

    # Cast activations to the compute dtype host-side (no repeated in-kernel
    # VALU cast passes; halves K/V VMEM footprint when cdt=bf16).
    q_c = q.astype(cdt)
    k_c = k.astype(cdt)
    v_c = v.astype(cdt)
    if Sq_pad != Sq:
        q_c = jnp.pad(q_c, ((0, 0), (0, Sq_pad - Sq), (0, 0)))

    has_mask = mask is not None
    if has_mask:
        m01 = (mask[:, 0] != 0).astype(jnp.bfloat16)   # (B, Sq, Sk) 0/1, half DMA
        if Sq_pad != Sq:
            m01 = jnp.pad(m01, ((0, 0), (0, Sq_pad - Sq), (0, 0)))
        mask_args = [m01]
        mask_specs = [pl.BlockSpec((1, block_q, Sk), lambda b, qi, h: (b, qi, 0))]
    else:
        mask_args, mask_specs = [], []

    qkv_specs = [
        pl.BlockSpec((1, block_q, D), lambda b, qi, h: (b, qi, 0)),   # q
        pl.BlockSpec((1, Sk, D), lambda b, qi, h: (b, 0, 0)),         # k
        pl.BlockSpec((1, Sk, D), lambda b, qi, h: (b, 0, 0)),         # v
    ]

    # Weights are VMEM-resident for the whole grid (constant block index);
    # the kernel indexes them by head id.
    def resident(shape):
        n = len(shape)
        return pl.BlockSpec(shape, lambda b, qi, h: (0,) * n)

    weight_args = [wq3, bq3, wk3, bk3, wv3, bv3, wo3, bo2]
    weight_specs = [
        resident((num_heads, D, hd)), resident((num_heads, 1, hd)),
        resident((num_heads, D, hd)), resident((num_heads, 1, hd)),
        resident((num_heads, D, hd)), resident((num_heads, 1, hd)),
        resident((num_heads, hd, D)), resident((1, D)),
    ]

    cache_kv = n_q > 1
    scratch = [pltpu.VMEM((block_q, D), jnp.float32)]
    if cache_kv:
        scratch += [pltpu.VMEM((num_heads, Sk, hd), cdt),
                    pltpu.VMEM((num_heads, Sk, hd), cdt)]

    kernel = functools.partial(_mha_kernel, has_mask=has_mask,
                               cache_kv=cache_kv, compute_dtype=cdt)

    out = pl.pallas_call(
        kernel,
        out_shape=jax.ShapeDtypeStruct((B, Sq_pad, D), out_dtype),
        grid_spec=pltpu.PrefetchScalarGridSpec(
            num_scalar_prefetch=0,
            grid=(B, n_q, num_heads),
            in_specs=qkv_specs + mask_specs + weight_specs,
            out_specs=pl.BlockSpec((1, block_q, D), lambda b, qi, h: (b, qi, 0)),
            scratch_shapes=scratch,
        ),
        compiler_params=pltpu.CompilerParams(
            # qi is "arbitrary": the per-core K/V-projection cache assumes the
            # q-tile axis is iterated sequentially (megacore shards batch only).
            dimension_semantics=("parallel", "arbitrary", "arbitrary"),
            vmem_limit_bytes=_default_vmem_limit_bytes(),
        ),
    )(q_c, k_c, v_c, *mask_args, *weight_args)

    if Sq_pad != Sq:
        out = out[:, :Sq, :]
    return out


def _reference(q, k, v, params, num_heads, mask=None):
    """Pure-JAX reference matching the PyTorch forward."""
    B, Sq, D = q.shape
    hd = D // num_heads

    def linear(x, w, b):
        return x @ w.T + b

    Q = linear(q, params["wq"], params["bq"])
    K = linear(k, params["wk"], params["bk"])
    V = linear(v, params["wv"], params["bv"])

    def split(x):
        return x.reshape(B, -1, num_heads, hd).transpose(0, 2, 1, 3)

    Qh, Kh, Vh = split(Q), split(K), split(V)
    scores = jnp.einsum("bhqd,bhkd->bhqk", Qh, Kh) / math.sqrt(hd)
    if mask is not None:
        scores = jnp.where(mask == 0, -1e9, scores)
    probs = jax.nn.softmax(scores, axis=-1)
    out = jnp.einsum("bhqk,bhkd->bhqd", probs, Vh)
    out = out.transpose(0, 2, 1, 3).reshape(B, Sq, D)
    return linear(out, params["wo"], params["bo"])


def _init_params(key, d_model):
    names = ["wq", "wk", "wv", "wo"]
    params = {}
    keys = jax.random.split(key, 8)
    bound = 1.0 / math.sqrt(d_model)
    for i, n in enumerate(names):
        params[n] = jax.random.uniform(
            keys[2 * i], (d_model, d_model), jnp.float32, -bound, bound)
        params["b" + n[1]] = jax.random.uniform(
            keys[2 * i + 1], (d_model,), jnp.float32, -bound, bound)
    return params


if __name__ == "__main__":
    B, S, D, H = 2, 8, 32, 4

    root = jax.random.PRNGKey(0)
    kq, kk, kv, kp = jax.random.split(root, 4)
    q = jax.random.normal(kq, (B, S, D), jnp.float32)
    k = jax.random.normal(kk, (B, S, D), jnp.float32)
    v = jax.random.normal(kv, (B, S, D), jnp.float32)
    params = _init_params(kp, D)

    ref = _reference(q, k, v, params, H)

    # 1) Default path (bf16 MXU operands, f32 accumulation), no mask.
    out = jax.block_until_ready(multi_head_attention(q, k, v, params, H))
    assert out.shape == (B, S, D)
    assert jnp.allclose(out, ref, atol=5e-2, rtol=5e-2), \
        f"bf16 no-mask max err {jnp.max(jnp.abs(out - ref))}"

    # 2) Exact-precision matmul path, tight tolerance.
    out32 = jax.block_until_ready(
        multi_head_attention(q, k, v, params, H, matmul_dtype=jnp.float32))
    assert jnp.allclose(out32, ref, atol=1e-3, rtol=1e-3), \
        f"f32 no-mask max err {jnp.max(jnp.abs(out32 - ref))}"

    # 3) Masked path (causal mask, [B, 1, Sq, Sk] 0/1 tensor like the module).
    mask = jnp.broadcast_to(jnp.tril(jnp.ones((S, S), jnp.float32)),
                            (B, 1, S, S))
    out_m = jax.block_until_ready(multi_head_attention(q, k, v, params, H, mask))
    ref_m = _reference(q, k, v, params, H, mask)
    assert jnp.allclose(out_m, ref_m, atol=5e-2, rtol=5e-2), \
        f"bf16 masked max err {jnp.max(jnp.abs(out_m - ref_m))}"

    # 4) Cross-attention with Sq not a multiple of block_q: exercises q-padding
    #    and the K/V-projection cache across q tiles (n_q > 1).
    Sq2, Sk2 = 12, S
    q2 = jax.random.normal(jax.random.PRNGKey(1), (B, Sq2, D), jnp.float32)
    valid = jnp.array([Sk2, 5])
    mask2 = (jnp.arange(Sk2)[None, None, None, :]
             < valid[:, None, None, None]).astype(jnp.float32)
    mask2 = jnp.broadcast_to(mask2, (B, 1, Sq2, Sk2))
    out2 = jax.block_until_ready(
        multi_head_attention(q2, k, v, params, H, mask2, block_q=8))
    ref2 = _reference(q2, k, v, params, H, mask2)
    assert out2.shape == (B, Sq2, D)
    assert jnp.allclose(out2, ref2, atol=5e-2, rtol=5e-2), \
        f"cross-attn max err {jnp.max(jnp.abs(out2 - ref2))}"

    print("KERNEL_OK")
</pallas_src>

<mosaic_0001>
module attributes {stable_mosaic.version = 11 : i64} {
  func.func @_mha_kernel(%arg0: i32, %arg1: i32, %arg2: i32, %arg3: memref<1x8x32xbf16, #tpu.memory_space<vmem>>, %arg4: memref<1x8x32xbf16, #tpu.memory_space<vmem>>, %arg5: memref<1x8x32xbf16, #tpu.memory_space<vmem>>, %arg6: memref<4x32x8xbf16, #tpu.memory_space<vmem>>, %arg7: memref<4x1x8xbf16, #tpu.memory_space<vmem>>, %arg8: memref<4x32x8xbf16, #tpu.memory_space<vmem>>, %arg9: memref<4x1x8xbf16, #tpu.memory_space<vmem>>, %arg10: memref<4x32x8xbf16, #tpu.memory_space<vmem>>, %arg11: memref<4x1x8xbf16, #tpu.memory_space<vmem>>, %arg12: memref<4x8x32xbf16, #tpu.memory_space<vmem>>, %arg13: memref<1x32xf32, #tpu.memory_space<vmem>>, %arg14: memref<1x8x32xf32, #tpu.memory_space<vmem>>, %arg15: memref<8x32xf32, #tpu.memory_space<vmem>>) attributes {dimension_semantics = [#tpu.dimension_semantics<parallel>, #tpu.dimension_semantics<arbitrary>, #tpu.dimension_semantics<arbitrary>], iteration_bounds = array<i64: 2, 1, 4>, scalar_prefetch = 0 : i64, scratch_operands = 1 : i64, tpu.core_type = #tpu.core_type<tc>, window_params = [{transform_indices = @transform_0, window_bounds = array<i64: 1, 8, 32>}, {transform_indices = @transform_1, window_bounds = array<i64: 1, 8, 32>}, {transform_indices = @transform_2, window_bounds = array<i64: 1, 8, 32>}, {pipeline_mode = #tpu.pipeline_mode<synchronous>, transform_indices = @transform_3, window_bounds = array<i64: 4, 32, 8>}, {pipeline_mode = #tpu.pipeline_mode<synchronous>, transform_indices = @transform_4, window_bounds = array<i64: 4, 1, 8>}, {pipeline_mode = #tpu.pipeline_mode<synchronous>, transform_indices = @transform_5, window_bounds = array<i64: 4, 32, 8>}, {pipeline_mode = #tpu.pipeline_mode<synchronous>, transform_indices = @transform_6, window_bounds = array<i64: 4, 1, 8>}, {pipeline_mode = #tpu.pipeline_mode<synchronous>, transform_indices = @transform_7, window_bounds = array<i64: 4, 32, 8>}, {pipeline_mode = #tpu.pipeline_mode<synchronous>, transform_indices = @transform_8, window_bounds = array<i64: 4, 1, 8>}, {pipeline_mode = #tpu.pipeline_mode<synchronous>, transform_indices = @transform_9, window_bounds = array<i64: 4, 8, 32>}, {pipeline_mode = #tpu.pipeline_mode<synchronous>, transform_indices = @transform_10, window_bounds = array<i64: 1, 32>}, {transform_indices = @transform_11, window_bounds = array<i64: 1, 8, 32>}]} {
    %c0 = arith.constant 0 : index
    %c0_0 = arith.constant 0 : index
    %c0_1 = arith.constant 0 : index
    %0 = vector.load %arg3[%c0, %c0_0, %c0_1] : memref<1x8x32xbf16, #tpu.memory_space<vmem>>, vector<1x8x32xbf16>
    %1 = vector.shape_cast %0 : vector<1x8x32xbf16> to vector<8x32xbf16>
    %2 = arith.index_cast %arg2 : i32 to index
    %c0_2 = arith.constant 0 : index
    %c0_3 = arith.constant 0 : index
    %3 = vector.load %arg6[%2, %c0_2, %c0_3] : memref<4x32x8xbf16, #tpu.memory_space<vmem>>, vector<1x32x8xbf16>
    %4 = vector.shape_cast %3 : vector<1x32x8xbf16> to vector<32x8xbf16>
    %cst = arith.constant dense<0.000000e+00> : vector<8x8xf32>
    %5 = tpu.matmul %1, %4, %cst {dimension_numbers = #tpu.dot_dimension_numbers<[1], [0], [0], [1], [0, 0, 1, 1], [], []>} : vector<8x32xbf16>, vector<32x8xbf16>, vector<8x8xf32> -> vector<8x8xf32>
    %6 = arith.index_cast %arg2 : i32 to index
    %c0_4 = arith.constant 0 : index
    %c0_5 = arith.constant 0 : index
    %7 = vector.load %arg7[%6, %c0_4, %c0_5] : memref<4x1x8xbf16, #tpu.memory_space<vmem>>, vector<1x1x8xbf16>
    %8 = vector.shape_cast %7 : vector<1x1x8xbf16> to vector<1x8xbf16>
    %9 = arith.extf %8 : vector<1x8xbf16> to vector<1x8xf32>
    %10 = vector.broadcast %9 : vector<1x8xf32> to vector<8x8xf32>
    %11 = arith.addf %5, %10 : vector<8x8xf32>
    %12 = arith.truncf %11 : vector<8x8xf32> to vector<8x8xbf16>
    %c0_6 = arith.constant 0 : index
    %c0_7 = arith.constant 0 : index
    %c0_8 = arith.constant 0 : index
    %13 = vector.load %arg4[%c0_6, %c0_7, %c0_8] : memref<1x8x32xbf16, #tpu.memory_space<vmem>>, vector<1x8x32xbf16>
    %14 = vector.shape_cast %13 : vector<1x8x32xbf16> to vector<8x32xbf16>
    %15 = arith.index_cast %arg2 : i32 to index
    %c0_9 = arith.constant 0 : index
    %c0_10 = arith.constant 0 : index
    %16 = vector.load %arg8[%15, %c0_9, %c0_10] : memref<4x32x8xbf16, #tpu.memory_space<vmem>>, vector<1x32x8xbf16>
    %17 = vector.shape_cast %16 : vector<1x32x8xbf16> to vector<32x8xbf16>
    %cst_11 = arith.constant dense<0.000000e+00> : vector<8x8xf32>
    %18 = tpu.matmul %14, %17, %cst_11 {dimension_numbers = #tpu.dot_dimension_numbers<[1], [0], [0], [1], [0, 0, 1, 1], [], []>} : vector<8x32xbf16>, vector<32x8xbf16>, vector<8x8xf32> -> vector<8x8xf32>
    %19 = arith.index_cast %arg2 : i32 to index
    %c0_12 = arith.constant 0 : index
    %c0_13 = arith.constant 0 : index
    %20 = vector.load %arg9[%19, %c0_12, %c0_13] : memref<4x1x8xbf16, #tpu.memory_space<vmem>>, vector<1x1x8xbf16>
    %21 = vector.shape_cast %20 : vector<1x1x8xbf16> to vector<1x8xbf16>
    %22 = arith.extf %21 : vector<1x8xbf16> to vector<1x8xf32>
    %23 = vector.broadcast %22 : vector<1x8xf32> to vector<8x8xf32>
    %24 = arith.addf %18, %23 : vector<8x8xf32>
    %25 = arith.truncf %24 : vector<8x8xf32> to vector<8x8xbf16>
    %c0_14 = arith.constant 0 : index
    %c0_15 = arith.constant 0 : index
    %c0_16 = arith.constant 0 : index
    %26 = vector.load %arg5[%c0_14, %c0_15, %c0_16] : memref<1x8x32xbf16, #tpu.memory_space<vmem>>, vector<1x8x32xbf16>
    %27 = vector.shape_cast %26 : vector<1x8x32xbf16> to vector<8x32xbf16>
    %28 = arith.index_cast %arg2 : i32 to index
    %c0_17 = arith.constant 0 : index
    %c0_18 = arith.constant 0 : index
    %29 = vector.load %arg10[%28, %c0_17, %c0_18] : memref<4x32x8xbf16, #tpu.memory_space<vmem>>, vector<1x32x8xbf16>
    %30 = vector.shape_cast %29 : vector<1x32x8xbf16> to vector<32x8xbf16>
    %cst_19 = arith.constant dense<0.000000e+00> : vector<8x8xf32>
    %31 = tpu.matmul %27, %30, %cst_19 {dimension_numbers = #tpu.dot_dimension_numbers<[1], [0], [0], [1], [0, 0, 1, 1], [], []>} : vector<8x32xbf16>, vector<32x8xbf16>, vector<8x8xf32> -> vector<8x8xf32>
    %32 = arith.index_cast %arg2 : i32 to index
    %c0_20 = arith.constant 0 : index
    %c0_21 = arith.constant 0 : index
    %33 = vector.load %arg11[%32, %c0_20, %c0_21] : memref<4x1x8xbf16, #tpu.memory_space<vmem>>, vector<1x1x8xbf16>
    %34 = vector.shape_cast %33 : vector<1x1x8xbf16> to vector<1x8xbf16>
    %35 = arith.extf %34 : vector<1x8xbf16> to vector<1x8xf32>
    %36 = vector.broadcast %35 : vector<1x8xf32> to vector<8x8xf32>
    %37 = arith.addf %31, %36 : vector<8x8xf32>
    %38 = arith.truncf %37 : vector<8x8xf32> to vector<8x8xbf16>
    %cst_22 = arith.constant dense<0.000000e+00> : vector<8x8xf32>
    %39 = tpu.matmul %12, %25, %cst_22 {dimension_numbers = #tpu.dot_dimension_numbers<[1], [1], [0], [0], [0, 0, 1, 0], [], []>} : vector<8x8xbf16>, vector<8x8xbf16>, vector<8x8xf32> -> vector<8x8xf32>
    %cst_23 = arith.constant dense<0xFF800000> : vector<8xf32>
    %40 = vector.multi_reduction <maximumf>, %39, %cst_23 [1] : vector<8x8xf32> to vector<8xf32>
    %41 = vector.shape_cast %40 : vector<8xf32> to vector<8x1xf32>
    %42 = vector.broadcast %41 : vector<8x1xf32> to vector<8x8xf32>
    %43 = arith.subf %39, %42 : vector<8x8xf32>
    %44 = math.exp %43 : vector<8x8xf32>
    %cst_24 = arith.constant dense<0.000000e+00> : vector<8xf32>
    %45 = vector.multi_reduction <add>, %44, %cst_24 [1] : vector<8x8xf32> to vector<8xf32>
    %46 = vector.shape_cast %45 : vector<8xf32> to vector<8x1xf32>
    %47 = arith.truncf %44 : vector<8x8xf32> to vector<8x8xbf16>
    %cst_25 = arith.constant dense<0.000000e+00> : vector<8x8xf32>
    %48 = tpu.matmul %47, %38, %cst_25 {dimension_numbers = #tpu.dot_dimension_numbers<[1], [0], [0], [1], [0, 0, 1, 1], [], []>} : vector<8x8xbf16>, vector<8x8xbf16>, vector<8x8xf32> -> vector<8x8xf32>
    %49 = tpu.reciprocal %46 {approx = true} : vector<8x1xf32> -> vector<8x1xf32>
    %50 = vector.broadcast %49 : vector<8x1xf32> to vector<8x8xf32>
    %51 = arith.mulf %48, %50 : vector<8x8xf32>
    %52 = arith.truncf %51 : vector<8x8xf32> to vector<8x8xbf16>
    %53 = arith.index_cast %arg2 : i32 to index
    %c0_26 = arith.constant 0 : index
    %c0_27 = arith.constant 0 : index
    %54 = vector.load %arg12[%53, %c0_26, %c0_27] : memref<4x8x32xbf16, #tpu.memory_space<vmem>>, vector<1x8x32xbf16>
    %55 = vector.shape_cast %54 : vector<1x8x32xbf16> to vector<8x32xbf16>
    %cst_28 = arith.constant dense<0.000000e+00> : vector<8x32xf32>
    %56 = tpu.matmul %52, %55, %cst_28 {dimension_numbers = #tpu.dot_dimension_numbers<[1], [0], [0], [1], [0, 0, 1, 1], [], []>} : vector<8x8xbf16>, vector<8x32xbf16>, vector<8x32xf32> -> vector<8x32xf32>
    %c0_i32 = arith.constant 0 : i32
    %57 = arith.cmpi eq, %arg2, %c0_i32 : i32
    %58 = arith.extui %57 : i1 to i32
    %c0_i32_29 = arith.constant 0 : i32
    %59 = arith.cmpi ne, %58, %c0_i32_29 : i32
    scf.if %59 {
      %cst_35 = arith.constant 0.000000e+00 : f32
      %66 = vector.broadcast %cst_35 : f32 to vector<8x32xf32>
      %c0_36 = arith.constant 0 : index
      %c0_37 = arith.constant 0 : index
      %67 = vector.load %arg15[%c0_36, %c0_37] : memref<8x32xf32, #tpu.memory_space<vmem>>, vector<8x32xf32>
      tpu.vector_store %arg15[%c0_36, %c0_37], %66 {strides = array<i32>} : memref<8x32xf32, #tpu.memory_space<vmem>>, vector<8x32xf32>,
    } else {
    }
    %c0_30 = arith.constant 0 : index
    %c0_31 = arith.constant 0 : index
    %60 = vector.load %arg15[%c0_30, %c0_31] : memref<8x32xf32, #tpu.memory_space<vmem>>, vector<8x32xf32>
    %61 = arith.addf %60, %56 : vector<8x32xf32>
    %c0_32 = arith.constant 0 : index
    %c0_33 = arith.constant 0 : index
    %62 = vector.load %arg15[%c0_32, %c0_33] : memref<8x32xf32, #tpu.memory_space<vmem>>, vector<8x32xf32>
    tpu.vector_store %arg15[%c0_32, %c0_33], %61 {strides = array<i32>} : memref<8x32xf32, #tpu.memory_space<vmem>>, vector<8x32xf32>,
    %c3_i32 = arith.constant 3 : i32
    %63 = arith.cmpi eq, %arg2, %c3_i32 : i32
    %64 = arith.extui %63 : i1 to i32
    %c0_i32_34 = arith.constant 0 : i32
    %65 = arith.cmpi ne, %64, %c0_i32_34 : i32
    scf.if %65 {
      %c0_35 = arith.constant 0 : index
      %c0_36 = arith.constant 0 : index
      %66 = vector.load %arg15[%c0_35, %c0_36] : memref<8x32xf32, #tpu.memory_space<vmem>>, vector<8x32xf32>
      %c0_37 = arith.constant 0 : index
      %c0_38 = arith.constant 0 : index
      %67 = vector.load %arg13[%c0_37, %c0_38] : memref<1x32xf32, #tpu.memory_space<vmem>>, vector<1x32xf32>
      %68 = vector.broadcast %67 : vector<1x32xf32> to vector<8x32xf32>
      %69 = arith.addf %66, %68 : vector<8x32xf32>
      %c0_39 = arith.constant 0 : index
      %c0_40 = arith.constant 0 : index
      %c0_41 = arith.constant 0 : index
      %70 = vector.load %arg14[%c0_39, %c0_40, %c0_41] : memref<1x8x32xf32, #tpu.memory_space<vmem>>, vector<1x8x32xf32>
      %71 = vector.shape_cast %70 : vector<1x8x32xf32> to vector<8x32xf32>
      %72 = vector.shape_cast %69 : vector<8x32xf32> to vector<1x8x32xf32>
      tpu.vector_store %arg14[%c0_39, %c0_40, %c0_41], %72 {strides = array<i32>} : memref<1x8x32xf32, #tpu.memory_space<vmem>>, vector<1x8x32xf32>,
    } else {
    }
    return
  }
  func.func @transform_0(%arg0: i32, %arg1: i32, %arg2: i32) -> (i32, i32, i32) {
    %c0_i32 = arith.constant 0 : i32
    %c0_i32_0 = arith.constant 0 : i32
    return %arg0, %arg1, %c0_i32 : i32, i32, i32
  }
  func.func @transform_1(%arg0: i32, %arg1: i32, %arg2: i32) -> (i32, i32, i32) {
    %c0_i32 = arith.constant 0 : i32
    %c0_i32_0 = arith.constant 0 : i32
    %c0_i32_1 = arith.constant 0 : i32
    return %arg0, %c0_i32, %c0_i32_0 : i32, i32, i32
  }
  func.func @transform_2(%arg0: i32, %arg1: i32, %arg2: i32) -> (i32, i32, i32) {
    %c0_i32 = arith.constant 0 : i32
    %c0_i32_0 = arith.constant 0 : i32
    %c0_i32_1 = arith.constant 0 : i32
    return %arg0, %c0_i32, %c0_i32_0 : i32, i32, i32
  }
  func.func @transform_3(%arg0: i32, %arg1: i32, %arg2: i32) -> (i32, i32, i32) {
    %c0_i32 = arith.constant 0 : i32
    %c0_i32_0 = arith.constant 0 : i32
    %c0_i32_1 = arith.constant 0 : i32
    %c0_i32_2 = arith.constant 0 : i32
    return %c0_i32, %c0_i32_0, %c0_i32_1 : i32, i32, i32
  }
  func.func @transform_4(%arg0: i32, %arg1: i32, %arg2: i32) -> (i32, i32, i32) {
    %c0_i32 = arith.constant 0 : i32
    %c0_i32_0 = arith.constant 0 : i32
    %c0_i32_1 = arith.constant 0 : i32
    %c0_i32_2 = arith.constant 0 : i32
    return %c0_i32, %c0_i32_0, %c0_i32_1 : i32, i32, i32
  }
  func.func @transform_5(%arg0: i32, %arg1: i32, %arg2: i32) -> (i32, i32, i32) {
    %c0_i32 = arith.constant 0 : i32
    %c0_i32_0 = arith.constant 0 : i32
    %c0_i32_1 = arith.constant 0 : i32
    %c0_i32_2 = arith.constant 0 : i32
    return %c0_i32, %c0_i32_0, %c0_i32_1 : i32, i32, i32
  }
  func.func @transform_6(%arg0: i32, %arg1: i32, %arg2: i32) -> (i32, i32, i32) {
    %c0_i32 = arith.constant 0 : i32
    %c0_i32_0 = arith.constant 0 : i32
    %c0_i32_1 = arith.constant 0 : i32
    %c0_i32_2 = arith.constant 0 : i32
    return %c0_i32, %c0_i32_0, %c0_i32_1 : i32, i32, i32
  }
  func.func @transform_7(%arg0: i32, %arg1: i32, %arg2: i32) -> (i32, i32, i32) {
    %c0_i32 = arith.constant 0 : i32
    %c0_i32_0 = arith.constant 0 : i32
    %c0_i32_1 = arith.constant 0 : i32
    %c0_i32_2 = arith.constant 0 : i32
    return %c0_i32, %c0_i32_0, %c0_i32_1 : i32, i32, i32
  }
  func.func @transform_8(%arg0: i32, %arg1: i32, %arg2: i32) -> (i32, i32, i32) {
    %c0_i32 = arith.constant 0 : i32
    %c0_i32_0 = arith.constant 0 : i32
    %c0_i32_1 = arith.constant 0 : i32
    %c0_i32_2 = arith.constant 0 : i32
    return %c0_i32, %c0_i32_0, %c0_i32_1 : i32, i32, i32
  }
  func.func @transform_9(%arg0: i32, %arg1: i32, %arg2: i32) -> (i32, i32, i32) {
    %c0_i32 = arith.constant 0 : i32
    %c0_i32_0 = arith.constant 0 : i32
    %c0_i32_1 = arith.constant 0 : i32
    %c0_i32_2 = arith.constant 0 : i32
    return %c0_i32, %c0_i32_0, %c0_i32_1 : i32, i32, i32
  }
  func.func @transform_10(%arg0: i32, %arg1: i32, %arg2: i32) -> (i32, i32) {
    %c0_i32 = arith.constant 0 : i32
    %c0_i32_0 = arith.constant 0 : i32
    %c0_i32_1 = arith.constant 0 : i32
    return %c0_i32, %c0_i32_0 : i32, i32
  }
  func.func @transform_11(%arg0: i32, %arg1: i32, %arg2: i32) -> (i32, i32, i32) {
    %c0_i32 = arith.constant 0 : i32
    %c0_i32_0 = arith.constant 0 : i32
    return %arg0, %arg1, %c0_i32 : i32, i32, i32
  }
}

</mosaic_0001>

<llo_original>
// kernel: tpu_custom_call.1
$region0: #{tpu_custom_call.1}
  #allocation0 [shape = 'u32[]', space=smem, size = 0x4, offset = 0x4, fixed_abs, tag = 'smem constant byte address 0x4 - core index']
  #allocation1 [shape = 'u32[144,128]{1,0:T(1,128)}', space=vmem, size = 0x12000, scoped, tag = 'internal scratch']
  #allocation2 [shape = 'f32[8,32]{1,0:T(8,128)}', space=vmem, size = 0x1000, scoped, tag = 'scratch operand']
  %s0 = inlined_call_operand.vmem [shape: bf16[2,8,32], index: 0, kind: input, shape index: {}]
  %s1 = inlined_call_operand.vmem [shape: bf16[2,8,32], index: 1, kind: input, shape index: {}]
  %s2 = inlined_call_operand.vmem [shape: bf16[2,8,32], index: 2, kind: input, shape index: {}]
  %s3 = inlined_call_operand.vmem [shape: bf16[4,32,8], index: 3, kind: input, shape index: {}]
  %s4 = inlined_call_operand.vmem [shape: bf16[4,1,8], index: 4, kind: input, shape index: {}]
  %s5 = inlined_call_operand.vmem [shape: bf16[4,32,8], index: 5, kind: input, shape index: {}]
  %s6 = inlined_call_operand.vmem [shape: bf16[4,1,8], index: 6, kind: input, shape index: {}]
  %s7 = inlined_call_operand.vmem [shape: bf16[4,32,8], index: 7, kind: input, shape index: {}]
  %s8 = inlined_call_operand.vmem [shape: bf16[4,1,8], index: 8, kind: input, shape index: {}]
  %s9 = inlined_call_operand.vmem [shape: bf16[4,8,32], index: 9, kind: input, shape index: {}]
  %s10 = inlined_call_operand.vmem [shape: f32[1,32], index: 10, kind: input, shape index: {}]
  %s11 = inlined_call_operand.hbm [shape: f32[2,8,32], index: 11, kind: output, shape index: {}]
  %s12 = sld [smem:[#allocation0]]
  $region85: #{tpu_custom_call.1} parent=0
    _
  %s14 = ssub.s32 1, %s12
  %s15 = scalar_select 0, %s14, %s12
  $region1: #{tpu_custom_call.1} parent=0
    #allocation3 [shape = 'u8[8192]{0}', space=vmem, size = 0x2000, scoped, tag = 'output window, operand 0']
    #allocation4 [shape = 's32[2]{0}', space=sflag, size = 0x8, scoped, tag = 'scoped memory for tpu_custom_call.1']
    %16 = vsyncpa [#allocation4], 0
    %s17 = scalar_lea.sflag [#allocation4], 1
    %18 = vsyncpa %s17, 0
    loop: start=0, step=1, limit=10
    $region2: #{tpu_custom_call.1} parent=1 // loop_pre_header
      _
    $region3: #{tpu_custom_call.1} parent=1 // loop_header
      %s20 = sphi 0, %s24
      %p21 = scmp.ge.s32.totalorder %s20, 10
      %s27 = sphi 0, %s46
      %s28 = sphi 0, %s42
      %s29 = sphi 0, %s38
      %s30 = sphi 0, %s27
      %s31 = sphi 0, %s28
      %s32 = sphi 0, %s29
      %s33 = sphi 0, %s30
      %s34 = sphi 0, %s31
      %s35 = sphi 0, %s32
      %s51 = sphi 0, %s53
      %s54 = sphi 0, %s51
      %s55 = sphi 0, %s54
      %s71 = sphi 0, %s55
      %s77 = sphi 0, %s79
      %s80 = sphi 0, %s77
      %s81 = sphi 0, %s80
      %s97 = sphi 0, %s81
      %s103 = sphi 0, %s105
      %s106 = sphi 0, %s103
      %s107 = sphi 0, %s106
      %s123 = sphi 0, %s107
      %s127 = sphi 0, %s127
      %s129 = sphi 0, %s127
      %s130 = sphi 0, %s129
      %s144 = sphi 0, %s130
      %s148 = sphi 0, %s148
      %s150 = sphi 0, %s148
      %s151 = sphi 0, %s150
      %s165 = sphi 0, %s151
      %s169 = sphi 0, %s169
      %s171 = sphi 0, %s169
      %s172 = sphi 0, %s171
      %s186 = sphi 0, %s172
      %s190 = sphi 0, %s190
      %s192 = sphi 0, %s190
      %s193 = sphi 0, %s192
      %s207 = sphi 0, %s193
      %s211 = sphi 0, %s211
      %s213 = sphi 0, %s211
      %s214 = sphi 0, %s213
      %s228 = sphi 0, %s214
      %s232 = sphi 0, %s232
      %s234 = sphi 0, %s232
      %s235 = sphi 0, %s234
      %s249 = sphi 0, %s235
      %s253 = sphi 0, %s253
      %s255 = sphi 0, %s253
      %s256 = sphi 0, %s255
      %s270 = sphi 0, %s256
      %s274 = sphi 0, %s274
      %s276 = sphi 0, %s274
      %s277 = sphi 0, %s276
      %s291 = sphi 0, %s277
      %s299 = sphi 0, %s301
      %s302 = sphi 0, %s299
      %s303 = sphi 0, %s302
      %s319 = sphi 0, %s303
    $region4: #{tpu_custom_call.1} parent=1 // loop_header_branch
      %23 = sbr.rel (%p21) target = $region8
    $region5: #{tpu_custom_call.1} parent=1 // loop_body
      %s25 = ssub.s32 %s20, 1
      %s26 = ssub.s32 %s20, 2
      %s36 = sadd.s32 1, %s29
      %p37 = scmp.ge.s32.totalorder %s36, 4
      %s38 = scalar_select %p37, 0, %s36
      %s39 = sadd.s32 1, %s28
      %s40 = scalar_select %p37, %s39, %s28
      %p41 = scmp.ge.s32.totalorder %s40, 1
      %s42 = scalar_select %p41, 0, %s40
      %s43 = sadd.s32 1, %s27
      %s44 = scalar_select %p41, %s43, %s27
      %p45 = scmp.ge.s32.totalorder %s44, 2
      %s46 = scalar_select %p45, 0, %s44
      %s47 = ssub.s32 %s27, %s46
      %s48 = ssub.s32 %s28, %s42
      %s49 = sor.u32 %s47, %s48
      %p50 = scmp.eq.s32.totalorder %s49, 0
      %s52 = sadd.s32 %s51, 1
      %s53 = scalar_select %p50, %s51, %s52
      %p56 = pneg %p50
      %p57 = scmp.eq.s32.totalorder %s20, 7
      %p58 = por %p56, %p57
      %p59 = scmp.ne.s32.totalorder %s51, %s54
      %p60 = scmp.eq.s32.totalorder %s20, 0
      %p61 = por %p59, %p60
      %p62 = scmp.ne.s32.totalorder %s51, %s54
      %p63 = scmp.eq.s32.totalorder %s25, 7
      %p64 = por %p62, %p63
      %p65 = scmp.ne.s32.totalorder %s54, %s55
      %p66 = scmp.eq.s32.totalorder %s25, 0
      %p67 = por %p65, %p66
      %p68 = scmp.ne.s32.totalorder %s54, %s55
      %p69 = scmp.eq.s32.totalorder %s26, 7
      %p70 = por %p68, %p69
      %p72 = scmp.ne.s32.totalorder %s55, %s71
      %p73 = scmp.eq.s32.totalorder %s26, 0
      %p74 = por %p72, %p73
      %s75 = ssub.s32 %s27, %s46
      %p76 = scmp.eq.s32.totalorder %s75, 0
      %s78 = sadd.s32 %s77, 1
      %s79 = scalar_select %p76, %s77, %s78
      %p82 = pneg %p76
      %p83 = scmp.eq.s32.totalorder %s20, 7
      %p84 = por %p82, %p83
      %p85 = scmp.ne.s32.totalorder %s77, %s80
      %p86 = scmp.eq.s32.totalorder %s20, 0
      %p87 = por %p85, %p86
      %p88 = scmp.ne.s32.totalorder %s77, %s80
      %p89 = scmp.eq.s32.totalorder %s25, 7
      %p90 = por %p88, %p89
      %p91 = scmp.ne.s32.totalorder %s80, %s81
      %p92 = scmp.eq.s32.totalorder %s25, 0
      %p93 = por %p91, %p92
      %p94 = scmp.ne.s32.totalorder %s80, %s81
      %p95 = scmp.eq.s32.totalorder %s26, 7
      %p96 = por %p94, %p95
      %p98 = scmp.ne.s32.totalorder %s81, %s97
      %p99 = scmp.eq.s32.totalorder %s26, 0
      %p100 = por %p98, %p99
      %s101 = ssub.s32 %s27, %s46
      %p102 = scmp.eq.s32.totalorder %s101, 0
      %s104 = sadd.s32 %s103, 1
      %s105 = scalar_select %p102, %s103, %s104
      %p108 = pneg %p102
      %p109 = scmp.eq.s32.totalorder %s20, 7
      %p110 = por %p108, %p109
      %p111 = scmp.ne.s32.totalorder %s103, %s106
      %p112 = scmp.eq.s32.totalorder %s20, 0
      %p113 = por %p111, %p112
      %p114 = scmp.ne.s32.totalorder %s103, %s106
      %p115 = scmp.eq.s32.totalorder %s25, 7
      %p116 = por %p114, %p115
      %p117 = scmp.ne.s32.totalorder %s106, %s107
      %p118 = scmp.eq.s32.totalorder %s25, 0
      %p119 = por %p117, %p118
      %p120 = scmp.ne.s32.totalorder %s106, %s107
      %p121 = scmp.eq.s32.totalorder %s26, 7
      %p122 = por %p120, %p121
      %p124 = scmp.ne.s32.totalorder %s107, %s123
      %p125 = scmp.eq.s32.totalorder %s26, 0
      %p126 = por %p124, %p125
      %s128 = sadd.s32 %s127, 1
      %p131 = scmp.eq.s32.totalorder %s20, 7
      %p132 = scmp.ne.s32.totalorder %s127, %s129
      %p133 = scmp.eq.s32.totalorder %s20, 0
      %p134 = por %p132, %p133
      %p135 = scmp.ne.s32.totalorder %s127, %s129
      %p136 = scmp.eq.s32.totalorder %s25, 7
      %p137 = por %p135, %p136
      %p138 = scmp.ne.s32.totalorder %s129, %s130
      %p139 = scmp.eq.s32.totalorder %s25, 0
      %p140 = por %p138, %p139
      %p141 = scmp.ne.s32.totalorder %s129, %s130
      %p142 = scmp.eq.s32.totalorder %s26, 7
      %p143 = por %p141, %p142
      %p145 = scmp.ne.s32.totalorder %s130, %s144
      %p146 = scmp.eq.s32.totalorder %s26, 0
      %p147 = por %p145, %p146
      %s149 = sadd.s32 %s148, 1
      %p152 = scmp.eq.s32.totalorder %s20, 7
      %p153 = scmp.ne.s32.totalorder %s148, %s150
      %p154 = scmp.eq.s32.totalorder %s20, 0
      %p155 = por %p153, %p154
      %p156 = scmp.ne.s32.totalorder %s148, %s150
      %p157 = scmp.eq.s32.totalorder %s25, 7
      %p158 = por %p156, %p157
      %p159 = scmp.ne.s32.totalorder %s150, %s151
      %p160 = scmp.eq.s32.totalorder %s25, 0
      %p161 = por %p159, %p160
      %p162 = scmp.ne.s32.totalorder %s150, %s151
      %p163 = scmp.eq.s32.totalorder %s26, 7
      %p164 = por %p162, %p163
      %p166 = scmp.ne.s32.totalorder %s151, %s165
      %p167 = scmp.eq.s32.totalorder %s26, 0
      %p168 = por %p166, %p167
      %s170 = sadd.s32 %s169, 1
      %p173 = scmp.eq.s32.totalorder %s20, 7
      %p174 = scmp.ne.s32.totalorder %s169, %s171
      %p175 = scmp.eq.s32.totalorder %s20, 0
      %p176 = por %p174, %p175
      %p177 = scmp.ne.s32.totalorder %s169, %s171
      %p178 = scmp.eq.s32.totalorder %s25, 7
      %p179 = por %p177, %p178
      %p180 = scmp.ne.s32.totalorder %s171, %s172
      %p181 = scmp.eq.s32.totalorder %s25, 0
      %p182 = por %p180, %p181
      %p183 = scmp.ne.s32.totalorder %s171, %s172
      %p184 = scmp.eq.s32.totalorder %s26, 7
      %p185 = por %p183, %p184
      %p187 = scmp.ne.s32.totalorder %s172, %s186
      %p188 = scmp.eq.s32.totalorder %s26, 0
      %p189 = por %p187, %p188
      %s191 = sadd.s32 %s190, 1
      %p194 = scmp.eq.s32.totalorder %s20, 7
      %p195 = scmp.ne.s32.totalorder %s190, %s192
      %p196 = scmp.eq.s32.totalorder %s20, 0
      %p197 = por %p195, %p196
      %p198 = scmp.ne.s32.totalorder %s190, %s192
      %p199 = scmp.eq.s32.totalorder %s25, 7
      %p200 = por %p198, %p199
      %p201 = scmp.ne.s32.totalorder %s192, %s193
      %p202 = scmp.eq.s32.totalorder %s25, 0
      %p203 = por %p201, %p202
      %p204 = scmp.ne.s32.totalorder %s192, %s193
      %p205 = scmp.eq.s32.totalorder %s26, 7
      %p206 = por %p204, %p205
      %p208 = scmp.ne.s32.totalorder %s193, %s207
      %p209 = scmp.eq.s32.totalorder %s26, 0
      %p210 = por %p208, %p209
      %s212 = sadd.s32 %s211, 1
      %p215 = scmp.eq.s32.totalorder %s20, 7
      %p216 = scmp.ne.s32.totalorder %s211, %s213
      %p217 = scmp.eq.s32.totalorder %s20, 0
      %p218 = por %p216, %p217
      %p219 = scmp.ne.s32.totalorder %s211, %s213
      %p220 = scmp.eq.s32.totalorder %s25, 7
      %p221 = por %p219, %p220
      %p222 = scmp.ne.s32.totalorder %s213, %s214
      %p223 = scmp.eq.s32.totalorder %s25, 0
      %p224 = por %p222, %p223
      %p225 = scmp.ne.s32.totalorder %s213, %s214
      %p226 = scmp.eq.s32.totalorder %s26, 7
      %p227 = por %p225, %p226
      %p229 = scmp.ne.s32.totalorder %s214, %s228
      %p230 = scmp.eq.s32.totalorder %s26, 0
      %p231 = por %p229, %p230
      %s233 = sadd.s32 %s232, 1
      %p236 = scmp.eq.s32.totalorder %s20, 7
      %p237 = scmp.ne.s32.totalorder %s232, %s234
      %p238 = scmp.eq.s32.totalorder %s20, 0
      %p239 = por %p237, %p238
      %p240 = scmp.ne.s32.totalorder %s232, %s234
      %p241 = scmp.eq.s32.totalorder %s25, 7
      %p242 = por %p240, %p241
      %p243 = scmp.ne.s32.totalorder %s234, %s235
      %p244 = scmp.eq.s32.totalorder %s25, 0
      %p245 = por %p243, %p244
      %p246 = scmp.ne.s32.totalorder %s234, %s235
      %p247 = scmp.eq.s32.totalorder %s26, 7
      %p248 = por %p246, %p247
      %p250 = scmp.ne.s32.totalorder %s235, %s249
      %p251 = scmp.eq.s32.totalorder %s26, 0
      %p252 = por %p250, %p251
      %s254 = sadd.s32 %s253, 1
      %p257 = scmp.eq.s32.totalorder %s20, 7
      %p258 = scmp.ne.s32.totalorder %s253, %s255
      %p259 = scmp.eq.s32.totalorder %s20, 0
      %p260 = por %p258, %p259
      %p261 = scmp.ne.s32.totalorder %s253, %s255
      %p262 = scmp.eq.s32.totalorder %s25, 7
      %p263 = por %p261, %p262
      %p264 = scmp.ne.s32.totalorder %s255, %s256
      %p265 = scmp.eq.s32.totalorder %s25, 0
      %p266 = por %p264, %p265
      %p267 = scmp.ne.s32.totalorder %s255, %s256
      %p268 = scmp.eq.s32.totalorder %s26, 7
      %p269 = por %p267, %p268
      %p271 = scmp.ne.s32.totalorder %s256, %s270
      %p272 = scmp.eq.s32.totalorder %s26, 0
      %p273 = por %p271, %p272
      %s275 = sadd.s32 %s274, 1
      %p278 = scmp.eq.s32.totalorder %s20, 7
      %p279 = scmp.ne.s32.totalorder %s274, %s276
      %p280 = scmp.eq.s32.totalorder %s20, 0
      %p281 = por %p279, %p280
      %p282 = scmp.ne.s32.totalorder %s274, %s276
      %p283 = scmp.eq.s32.totalorder %s25, 7
      %p284 = por %p282, %p283
      %p285 = scmp.ne.s32.totalorder %s276, %s277
      %p286 = scmp.eq.s32.totalorder %s25, 0
      %p287 = por %p285, %p286
      %p288 = scmp.ne.s32.totalorder %s276, %s277
      %p289 = scmp.eq.s32.totalorder %s26, 7
      %p290 = por %p288, %p289
      %p292 = scmp.ne.s32.totalorder %s277, %s291
      %p293 = scmp.eq.s32.totalorder %s26, 0
      %p294 = por %p292, %p293
      %s295 = ssub.s32 %s27, %s46
      %s296 = ssub.s32 %s28, %s42
      %s297 = sor.u32 %s295, %s296
      %p298 = scmp.eq.s32.totalorder %s297, 0
      %s300 = sadd.s32 %s299, 1
      %s301 = scalar_select %p298, %s299, %s300
      %p304 = pneg %p298
      %p305 = scmp.eq.s32.totalorder %s20, 7
      %p306 = por %p304, %p305
      %p307 = scmp.ne.s32.totalorder %s299, %s302
      %p308 = scmp.eq.s32.totalorder %s20, 0
      %p309 = por %p307, %p308
      %p310 = scmp.ne.s32.totalorder %s299, %s302
      %p311 = scmp.eq.s32.totalorder %s25, 7
      %p312 = por %p310, %p311
      %p313 = scmp.ne.s32.totalorder %s302, %s303
      %p314 = scmp.eq.s32.totalorder %s25, 0
      %p315 = por %p313, %p314
      %p316 = scmp.ne.s32.totalorder %s302, %s303
      %p317 = scmp.eq.s32.totalorder %s26, 7
      %p318 = por %p316, %p317
      %p320 = scmp.ne.s32.totalorder %s303, %s319
      %p321 = scmp.eq.s32.totalorder %s26, 0
      %p322 = por %p320, %p321
      %p323 = scmp.le.s32.totalorder 1, %s20
      %p324 = scmp.lt.s32.totalorder %s20, 9
      %p325 = pnand %p323, %p324
      %p326 = pneg %p325
      // Predicated region
      $region9: #{tpu_custom_call.1} parent=5 // pred_check
        _
      $region10: #{tpu_custom_call.1} parent=5 // pred_check_branch
        %328 = sbr.rel (%p325) target = $region12
      $region11: #{tpu_custom_call.1} parent=5 // pred_region
        %s329 = ssub.s32 %s20, 1
        // Predicated region
        $region13: #{tpu_custom_call.1} parent=11 // pred_check
          %p330 = pneg %p140
        $region14: #{tpu_custom_call.1} parent=11 // pred_check_branch
          %332 = sbr.rel (%p330) target = $region16
        $region15: #{tpu_custom_call.1} parent=11 // pred_region
          _
        $region16: #{tpu_custom_call.1} parent=11 // pred_fallthru
          _
        // Predicated region
        $region17: #{tpu_custom_call.1} parent=11 // pred_check
          %p333 = pneg %p161
        $region18: #{tpu_custom_call.1} parent=11 // pred_check_branch
          %335 = sbr.rel (%p333) target = $region20
        $region19: #{tpu_custom_call.1} parent=11 // pred_region
          _
        $region20: #{tpu_custom_call.1} parent=11 // pred_fallthru
          _
        // Predicated region
        $region21: #{tpu_custom_call.1} parent=11 // pred_check
          %p336 = pneg %p182
        $region22: #{tpu_custom_call.1} parent=11 // pred_check_branch
          %338 = sbr.rel (%p336) target = $region24
        $region23: #{tpu_custom_call.1} parent=11 // pred_region
          _
        $region24: #{tpu_custom_call.1} parent=11 // pred_fallthru
          _
        // Predicated region
        $region25: #{tpu_custom_call.1} parent=11 // pred_check
          %p339 = pneg %p203
        $region26: #{tpu_custom_call.1} parent=11 // pred_check_branch
          %341 = sbr.rel (%p339) target = $region28
        $region27: #{tpu_custom_call.1} parent=11 // pred_region
          _
        $region28: #{tpu_custom_call.1} parent=11 // pred_fallthru
          _
        // Predicated region
        $region29: #{tpu_custom_call.1} parent=11 // pred_check
          %p342 = pneg %p224
        $region30: #{tpu_custom_call.1} parent=11 // pred_check_branch
          %344 = sbr.rel (%p342) target = $region32
        $region31: #{tpu_custom_call.1} parent=11 // pred_region
          _
        $region32: #{tpu_custom_call.1} parent=11 // pred_fallthru
          _
        // Predicated region
        $region33: #{tpu_custom_call.1} parent=11 // pred_check
          %p345 = pneg %p245
        $region34: #{tpu_custom_call.1} parent=11 // pred_check_branch
          %347 = sbr.rel (%p345) target = $region36
        $region35: #{tpu_custom_call.1} parent=11 // pred_region
          _
        $region36: #{tpu_custom_call.1} parent=11 // pred_fallthru
          _
        // Predicated region
        $region37: #{tpu_custom_call.1} parent=11 // pred_check
          %p348 = pneg %p266
        $region38: #{tpu_custom_call.1} parent=11 // pred_check_branch
          %350 = sbr.rel (%p348) target = $region40
        $region39: #{tpu_custom_call.1} parent=11 // pred_region
          _
        $region40: #{tpu_custom_call.1} parent=11 // pred_fallthru
          _
        // Predicated region
        $region41: #{tpu_custom_call.1} parent=11 // pred_check
          %p351 = pneg %p287
        $region42: #{tpu_custom_call.1} parent=11 // pred_check_branch
          %353 = sbr.rel (%p351) target = $region44
        $region43: #{tpu_custom_call.1} parent=11 // pred_region
          _
        $region44: #{tpu_custom_call.1} parent=11 // pred_fallthru
          _
      $region12: #{tpu_custom_call.1} parent=5 // pred_fallthru
        _
      %p354 = scmp.lt.s32.totalorder %s20, 8
      // Predicated region
      $region45: #{tpu_custom_call.1} parent=5 // pred_check
        %p355 = pneg %p354
      $region46: #{tpu_custom_call.1} parent=5 // pred_check_branch
        %357 = sbr.rel (%p355) target = $region48
      $region47: #{tpu_custom_call.1} parent=5 // pred_region
        // Predicated region
        $region49: #{tpu_custom_call.1} parent=47 // pred_check
          %p358 = pneg %p61
        $region50: #{tpu_custom_call.1} parent=47 // pred_check_branch
          %360 = sbr.rel (%p358) target = $region52
        $region51: #{tpu_custom_call.1} parent=47 // pred_region
          %p361 = scmp.lt.s32.totalorder %s27, 1
          %s362 = scalar_select %p361, %s27, 1
          %p363 = scmp.lt.s32.totalorder %s28, 0
          %s364 = scalar_select %p363, %s28, 0
          %s365 = sadd.s32 %s364, %s362
          %s366 = smul.addr %s365, 4
          %s367 = scalar_lea.vmem %s0, %s366
        $region52: #{tpu_custom_call.1} parent=47 // pred_fallthru
          _
        // Predicated region
        $region53: #{tpu_custom_call.1} parent=47 // pred_check
          %p368 = pneg %p87
        $region54: #{tpu_custom_call.1} parent=47 // pred_check_branch
          %370 = sbr.rel (%p368) target = $region56
        $region55: #{tpu_custom_call.1} parent=47 // pred_region
          %p371 = scmp.lt.s32.totalorder %s27, 1
          %s372 = scalar_select %p371, %s27, 1
          %s373 = smul.addr %s372, 4
          %s374 = scalar_lea.vmem %s1, %s373
        $region56: #{tpu_custom_call.1} parent=47 // pred_fallthru
          _
        // Predicated region
        $region57: #{tpu_custom_call.1} parent=47 // pred_check
          %p375 = pneg %p113
        $region58: #{tpu_custom_call.1} parent=47 // pred_check_branch
          %377 = sbr.rel (%p375) target = $region60
        $region59: #{tpu_custom_call.1} parent=47 // pred_region
          %p378 = scmp.lt.s32.totalorder %s27, 1
          %s379 = scalar_select %p378, %s27, 1
          %s380 = smul.addr %s379, 4
          %s381 = scalar_lea.vmem %s2, %s380
        $region60: #{tpu_custom_call.1} parent=47 // pred_fallthru
          _
      $region48: #{tpu_custom_call.1} parent=5 // pred_fallthru
        _
      %p382 = scmp.le.s32.totalorder 1, %s20
      %p383 = scmp.lt.s32.totalorder %s20, 9
      %p384 = pnand %p382, %p383
      %p385 = pneg %p384
      // Predicated region
      $region61: #{tpu_custom_call.1} parent=5 // pred_check
        _
      $region62: #{tpu_custom_call.1} parent=5 // pred_check_branch
        %387 = sbr.rel (%p384) target = $region64
      $region63: #{tpu_custom_call.1} parent=5 // pred_region
        %s388 = ssub.s32 %s20, 1
        %p389 = scmp.lt.s32.totalorder %s30, 1
        %s390 = scalar_select %p389, %s30, 1
        %p391 = scmp.lt.s32.totalorder %s31, 0
        %s392 = scalar_select %p391, %s31, 0
        %s393 = sadd.s32 %s392, %s390
        %s394 = smul.addr %s393, 4
        %s395 = scalar_lea.vmem %s0, %s394
        %p396 = pneg %p67
        %p397 = pneg %p64
        %p398 = scmp.lt.s32.totalorder %s30, 1
        %s399 = scalar_select %p398, %s30, 1
        %s400 = smul.addr %s399, 4
        %s401 = scalar_lea.vmem %s1, %s400
        %p402 = pneg %p93
        %p403 = pneg %p90
        %p404 = scmp.lt.s32.totalorder %s30, 1
        %s405 = scalar_select %p404, %s30, 1
        %s406 = smul.addr %s405, 4
        %s407 = scalar_lea.vmem %s2, %s406
        %p408 = pneg %p119
        %p409 = pneg %p116
        %p410 = pneg %p140
        %p411 = pneg %p137
        %p412 = pneg %p161
        %p413 = pneg %p158
        %p414 = pneg %p182
        %p415 = pneg %p179
        %p416 = pneg %p203
        %p417 = pneg %p200
        %p418 = pneg %p224
        %p419 = pneg %p221
        %p420 = pneg %p245
        %p421 = pneg %p242
        %p422 = pneg %p266
        %p423 = pneg %p263
        %p424 = pneg %p287
        %p425 = pneg %p284
        %p426 = pneg %p315
        %p427 = pneg %p312
        %s428 = sand.u32 %s302, 1
        %s429 = scalar_lea.sflag [#allocation4], %s428
        %s430 = sand.u32 %s302, 1
        %s431 = smul.addr %s430, 8
        %s432 = scalar_lea.vmem [#allocation3], %s431
        %p433 = scmp.lt.s32.totalorder %s30, 1
        %s434 = scalar_select %p433, %s30, 1
        %p435 = scmp.lt.s32.totalorder %s31, 0
        %s436 = scalar_select %p435, %s31, 0
        %s437 = sadd.s32 %s436, %s434
        %s438 = smul.addr %s437, 4
        %s439 = scalar_lea.vmem %s0, %s438
        %p440 = scmp.lt.s32.totalorder %s30, 1
        %s441 = scalar_select %p440, %s30, 1
        %s442 = smul.addr %s441, 4
        %s443 = scalar_lea.vmem %s1, %s442
        %p444 = scmp.lt.s32.totalorder %s30, 1
        %s445 = scalar_select %p444, %s30, 1
        %s446 = smul.addr %s445, 4
        %s447 = scalar_lea.vmem %s2, %s446
        %v449 = vld [vmem:[%s439] sm:$0xf]
        %s450 = smul.u32 %s32, 4
        %s451 = smul.addr %s450, 4
        %s452 = scalar_lea.vmem %s3, %s451
        %v453 = vld [vmem:[%s452] sm:$0xf]
        %v454 = vld [vmem:[%s452 + $0x4] sm:$0xf]
        %v455 = vld [vmem:[%s452 + $0x8] sm:$0xf]
        %v456 = vld [vmem:[%s452 + $0xc] sm:$0xf]
        %s457 = scalar_lea.vmem %s4, %s32
        %v458 = vld [vmem:[%s457] sm:$0x1]
        %v459 = vunpack.c.l.bf16 %v458
        %v460 = vlaneseq
        %v461 = vshrl.u32 %v460, 7
        %v462 = vsub.s32 0, %v461
        %v463 = vrot.slane %v459, %v462
        %v468 = vunpack.c.l.b16 %v453
        %v469 = vunpack.c.l.b16 %v454
        %v470 = vunpack.c.l.b16 %v455
        %v471 = vunpack.c.l.b16 %v456
        %v472 = vpack.c.b16 %v469, %v468
        %v473 = vpack.c.b16 %v471, %v470
        %vm476 = vcmask 261120
        %v478 = vsel %vm476, %v449, 0
        %480 = vmatprep.subr.bf16.mxu0 0
        %481 = vmatpush1.bf16.msra.mxu0 %v472
        %482 = vmatprep.subr.bf16.mxu0 0
        %483 = vmatpush1.bf16.msra.mxu0 %v473
        %484 = vmatprep.subr.bf16.mxu0 0
        %485 = vmatpush1.bf16.msra.mxu0 0
        %486 = vmatprep.subr.bf16.mxu0 0
        %487 = vmatpush1.bf16.msra.mxu0 0
        %488 = vmatprep.subr.bf16.mxu0 0
        %489 = vmatpush1.bf16.msra.mxu0 0
        %490 = vmatprep.subr.bf16.mxu0 0
        %491 = vmatpush1.bf16.msra.mxu0 0
        %492 = vmatprep.subr.bf16.mxu0 0
        %493 = vmatpush1.bf16.msra.mxu0 0
        %494 = vmatprep.subr.bf16.mxu0 0
        %495 = vmatpush1.bf16.msra.mxu0 0
        %496 = vmatprep.subr.bf16.mxu0 0
        %497 = vmatpush1.bf16.msra.mxu0 0
        %498 = vmatprep.subr.bf16.mxu0 0
        %499 = vmatpush1.bf16.msra.mxu0 0
        %500 = vmatprep.subr.bf16.mxu0 0
        %501 = vmatpush1.bf16.msra.mxu0 0
        %502 = vmatprep.subr.bf16.mxu0 0
        %503 = vmatpush1.bf16.msra.mxu0 0
        %504 = vmatprep.subr.bf16.mxu0 0
        %505 = vmatpush1.bf16.msra.mxu0 0
        %506 = vmatprep.subr.bf16.mxu0 0
        %507 = vmatpush1.bf16.msra.mxu0 0
        %508 = vmatprep.subr.bf16.mxu0 0
        %509 = vmatpush1.bf16.msra.mxu0 0
        %510 = vmatprep.subr.bf16.mxu0 0
        %511 = vmatpush1.bf16.msra.mxu0 0
        %512 = vmatprep.mubr.bf16.mxu0 0
        %513 = vmatmul.mubr.bf16.gmra.mrb[0].mxu0 %v478
        %v514 = vpop.f32.mrb[0].mxu0
        %v515 = vadd.f32 %v463, %v514
        %v516 = vpop.f32.mrb[0].mxu0
        %v517 = vpop.f32.mrb[0].mxu0
        %v518 = vpop.f32.mrb[0].mxu0
        %519 = vdwg.mxu0
        %v520 = vpack.c.bf16 %v515, %v515
        %v521 = vld [vmem:[%s443] sm:$0xf]
        %s522 = smul.addr %s450, 4
        %s523 = scalar_lea.vmem %s5, %s522
        %v524 = vld [vmem:[%s523] sm:$0xf]
        %v525 = vld [vmem:[%s523 + $0x4] sm:$0xf]
        %v526 = vld [vmem:[%s523 + $0x8] sm:$0xf]
        %v527 = vld [vmem:[%s523 + $0xc] sm:$0xf]
        %s528 = scalar_lea.vmem %s6, %s32
        %v529 = vld [vmem:[%s528] sm:$0x1]
        %v530 = vunpack.c.l.bf16 %v529
        %v531 = vlaneseq
        %v532 = vshrl.u32 %v531, 7
        %v533 = vsub.s32 0, %v532
        %v534 = vrot.slane %v530, %v533
        %v539 = vunpack.c.l.b16 %v524
        %v540 = vunpack.c.l.b16 %v525
        %v541 = vunpack.c.l.b16 %v526
        %v542 = vunpack.c.l.b16 %v527
        %v543 = vpack.c.b16 %v540, %v539
        %v544 = vpack.c.b16 %v542, %v541
        %v548 = vsel %vm476, %v521, 0
        %550 = vmatprep.subr.bf16.mxu0 0
        %551 = vmatpush1.bf16.msra.mxu0 %v543
        %552 = vmatprep.subr.bf16.mxu0 0
        %553 = vmatpush1.bf16.msra.mxu0 %v544
        %554 = vmatprep.subr.bf16.mxu0 0
        %555 = vmatpush1.bf16.msra.mxu0 0
        %556 = vmatprep.subr.bf16.mxu0 0
        %557 = vmatpush1.bf16.msra.mxu0 0
        %558 = vmatprep.subr.bf16.mxu0 0
        %559 = vmatpush1.bf16.msra.mxu0 0
        %560 = vmatprep.subr.bf16.mxu0 0
        %561 = vmatpush1.bf16.msra.mxu0 0
        %562 = vmatprep.subr.bf16.mxu0 0
        %563 = vmatpush1.bf16.msra.mxu0 0
        %564 = vmatprep.subr.bf16.mxu0 0
        %565 = vmatpush1.bf16.msra.mxu0 0
        %566 = vmatprep.subr.bf16.mxu0 0
        %567 = vmatpush1.bf16.msra.mxu0 0
        %568 = vmatprep.subr.bf16.mxu0 0
        %569 = vmatpush1.bf16.msra.mxu0 0
        %570 = vmatprep.subr.bf16.mxu0 0
        %571 = vmatpush1.bf16.msra.mxu0 0
        %572 = vmatprep.subr.bf16.mxu0 0
        %573 = vmatpush1.bf16.msra.mxu0 0
        %574 = vmatprep.subr.bf16.mxu0 0
        %575 = vmatpush1.bf16.msra.mxu0 0
        %576 = vmatprep.subr.bf16.mxu0 0
        %577 = vmatpush1.bf16.msra.mxu0 0
        %578 = vmatprep.subr.bf16.mxu0 0
        %579 = vmatpush1.bf16.msra.mxu0 0
        %580 = vmatprep.subr.bf16.mxu0 0
        %581 = vmatpush1.bf16.msra.mxu0 0
        %582 = vmatprep.mubr.bf16.mxu0 0
        %583 = vmatmul.mubr.bf16.gmra.mrb[0].mxu0 %v548
        %v584 = vpop.f32.mrb[0].mxu0
        %v585 = vadd.f32 %v534, %v584
        %v586 = vpop.f32.mrb[0].mxu0
        %v587 = vpop.f32.mrb[0].mxu0
        %v588 = vpop.f32.mrb[0].mxu0
        %589 = vdwg.mxu0
        %v590 = vpack.c.bf16 %v585, %v585
        %v591 = vld [vmem:[%s447] sm:$0xf]
        %s592 = smul.addr %s450, 4
        %s593 = scalar_lea.vmem %s7, %s592
        %v594 = vld [vmem:[%s593] sm:$0xf]
        %v595 = vld [vmem:[%s593 + $0x4] sm:$0xf]
        %v596 = vld [vmem:[%s593 + $0x8] sm:$0xf]
        %v597 = vld [vmem:[%s593 + $0xc] sm:$0xf]
        %s598 = scalar_lea.vmem %s8, %s32
        %v599 = vld [vmem:[%s598] sm:$0x1]
        %v600 = vunpack.c.l.bf16 %v599
        %v601 = vlaneseq
        %v602 = vshrl.u32 %v601, 7
        %v603 = vsub.s32 0, %v602
        %v604 = vrot.slane %v600, %v603
        %v609 = vunpack.c.l.b16 %v594
        %v610 = vunpack.c.l.b16 %v595
        %v611 = vunpack.c.l.b16 %v596
        %v612 = vunpack.c.l.b16 %v597
        %v613 = vpack.c.b16 %v610, %v609
        %v614 = vpack.c.b16 %v612, %v611
        %v618 = vsel %vm476, %v591, 0
        %620 = vmatprep.subr.bf16.mxu0 0
        %621 = vmatpush1.bf16.msra.mxu0 %v613
        %622 = vmatprep.subr.bf16.mxu0 0
        %623 = vmatpush1.bf16.msra.mxu0 %v614
        %624 = vmatprep.subr.bf16.mxu0 0
        %625 = vmatpush1.bf16.msra.mxu0 0
        %626 = vmatprep.subr.bf16.mxu0 0
        %627 = vmatpush1.bf16.msra.mxu0 0
        %628 = vmatprep.subr.bf16.mxu0 0
        %629 = vmatpush1.bf16.msra.mxu0 0
        %630 = vmatprep.subr.bf16.mxu0 0
        %631 = vmatpush1.bf16.msra.mxu0 0
        %632 = vmatprep.subr.bf16.mxu0 0
        %633 = vmatpush1.bf16.msra.mxu0 0
        %634 = vmatprep.subr.bf16.mxu0 0
        %635 = vmatpush1.bf16.msra.mxu0 0
        %636 = vmatprep.subr.bf16.mxu0 0
        %637 = vmatpush1.bf16.msra.mxu0 0
        %638 = vmatprep.subr.bf16.mxu0 0
        %639 = vmatpush1.bf16.msra.mxu0 0
        %640 = vmatprep.subr.bf16.mxu0 0
        %641 = vmatpush1.bf16.msra.mxu0 0
        %642 = vmatprep.subr.bf16.mxu0 0
        %643 = vmatpush1.bf16.msra.mxu0 0
        %644 = vmatprep.subr.bf16.mxu0 0
        %645 = vmatpush1.bf16.msra.mxu0 0
        %646 = vmatprep.subr.bf16.mxu0 0
        %647 = vmatpush1.bf16.msra.mxu0 0
        %648 = vmatprep.subr.bf16.mxu0 0
        %649 = vmatpush1.bf16.msra.mxu0 0
        %650 = vmatprep.subr.bf16.mxu0 0
        %651 = vmatpush1.bf16.msra.mxu0 0
        %652 = vmatprep.mubr.bf16.mxu0 0
        %653 = vmatmul.mubr.bf16.gmra.mrb[0].mxu0 %v618
        %v654 = vpop.f32.mrb[0].mxu0
        %v655 = vadd.f32 %v604, %v654
        %v656 = vpop.f32.mrb[0].mxu0
        %v657 = vpop.f32.mrb[0].mxu0
        %v658 = vpop.f32.mrb[0].mxu0
        %659 = vdwg.mxu0
        %v660 = vpack.c.bf16 %v655, %v655
        %vm661 = vcmask 64512
        %v663 = vsel %vm661, %v520, 0
        %v666 = vsel %vm661, %v590, 0
        %668 = vmatprep.subr.bf16.mxu0 0
        %669 = vmatpush1.bf16.xpose.msra.mxu0 %v666
        %670 = vmatprep.subr.bf16.mxu0 0
        %671 = vmatpush1.bf16.xpose.msra.mxu0 0
        %672 = vmatprep.subr.bf16.mxu0 0
        %673 = vmatpush1.bf16.xpose.msra.mxu0 0
        %674 = vmatprep.subr.bf16.mxu0 0
        %675 = vmatpush1.bf16.xpose.msra.mxu0 0
        %676 = vmatprep.subr.bf16.mxu0 0
        %677 = vmatpush1.bf16.xpose.msra.mxu0 0
        %678 = vmatprep.subr.bf16.mxu0 0
        %679 = vmatpush1.bf16.xpose.msra.mxu0 0
        %680 = vmatprep.subr.bf16.mxu0 0
        %681 = vmatpush1.bf16.xpose.msra.mxu0 0
        %682 = vmatprep.subr.bf16.mxu0 0
        %683 = vmatpush1.bf16.xpose.msra.mxu0 0
        %684 = vmatprep.subr.bf16.mxu0 0
        %685 = vmatpush1.bf16.xpose.msra.mxu0 0
        %686 = vmatprep.subr.bf16.mxu0 0
        %687 = vmatpush1.bf16.xpose.msra.mxu0 0
        %688 = vmatprep.subr.bf16.mxu0 0
        %689 = vmatpush1.bf16.xpose.msra.mxu0 0
        %690 = vmatprep.subr.bf16.mxu0 0
        %691 = vmatpush1.bf16.xpose.msra.mxu0 0
        %692 = vmatprep.subr.bf16.mxu0 0
        %693 = vmatpush1.bf16.xpose.msra.mxu0 0
        %694 = vmatprep.subr.bf16.mxu0 0
        %695 = vmatpush1.bf16.xpose.msra.mxu0 0
        %696 = vmatprep.subr.bf16.mxu0 0
        %697 = vmatpush1.bf16.xpose.msra.mxu0 0
        %698 = vmatprep.subr.bf16.mxu0 0
        %699 = vmatpush1.bf16.xpose.msra.mxu0 0
        %700 = vmatprep.mubr.bf16.mxu0 0
        %701 = vmatmul.mubr.bf16.gmra.mrb[0].mxu0 %v663
        %v702 = vpop.f32.mrb[0].mxu0
        %v703 = vadd.f32 0.0, %v702
        %v704 = vpop.f32.mrb[0].mxu0
        %v705 = vpop.f32.mrb[0].mxu0
        %v706 = vpop.f32.mrb[0].mxu0
        %707 = vdwg.mxu0
        %v708 = vsel %vm661, %v703, -inf
        %709 = vmax.xlane.f32.xlu0 %v708
        %v710 = vpop.xlane.xlu0 %709
        %v711 = vsub.f32 %v703, %v710
        %v712 = vmul.f32 %v711, 1.442695
        %v713 = vpow.pop %v712
        %v714 = vsel %vm661, %v713, 0.0
        %715 = vadd.xlane.f32.xlu0 %v714
        %v716 = vpop.xlane.xlu0 %715
        %v717 = vpack.c.bf16 %v713, %v713
        %v719 = vsel %vm661, %v717, 0
        %vm721 = vcmask 1043456
        %v723 = vsel %vm721, %v660, 0
        %725 = vmatprep.subr.bf16.mxu0 0
        %726 = vmatpush1.bf16.msra.mxu0 %v723
        %727 = vmatprep.subr.bf16.mxu0 0
        %728 = vmatpush1.bf16.msra.mxu0 0
        %729 = vmatprep.subr.bf16.mxu0 0
        %730 = vmatpush1.bf16.msra.mxu0 0
        %731 = vmatprep.subr.bf16.mxu0 0
        %732 = vmatpush1.bf16.msra.mxu0 0
        %733 = vmatprep.subr.bf16.mxu0 0
        %734 = vmatpush1.bf16.msra.mxu0 0
        %735 = vmatprep.subr.bf16.mxu0 0
        %736 = vmatpush1.bf16.msra.mxu0 0
        %737 = vmatprep.subr.bf16.mxu0 0
        %738 = vmatpush1.bf16.msra.mxu0 0
        %739 = vmatprep.subr.bf16.mxu0 0
        %740 = vmatpush1.bf16.msra.mxu0 0
        %741 = vmatprep.subr.bf16.mxu0 0
        %742 = vmatpush1.bf16.msra.mxu0 0
        %743 = vmatprep.subr.bf16.mxu0 0
        %744 = vmatpush1.bf16.msra.mxu0 0
        %745 = vmatprep.subr.bf16.mxu0 0
        %746 = vmatpush1.bf16.msra.mxu0 0
        %747 = vmatprep.subr.bf16.mxu0 0
        %748 = vmatpush1.bf16.msra.mxu0 0
        %749 = vmatprep.subr.bf16.mxu0 0
        %750 = vmatpush1.bf16.msra.mxu0 0
        %751 = vmatprep.subr.bf16.mxu0 0
        %752 = vmatpush1.bf16.msra.mxu0 0
        %753 = vmatprep.subr.bf16.mxu0 0
        %754 = vmatpush1.bf16.msra.mxu0 0
        %755 = vmatprep.subr.bf16.mxu0 0
        %756 = vmatpush1.bf16.msra.mxu0 0
        %757 = vmatprep.mubr.bf16.mxu0 0
        %758 = vmatmul.mubr.bf16.gmra.mrb[0].mxu0 %v719
        %v759 = vpop.f32.mrb[0].mxu0
        %v760 = vadd.f32 0.0, %v759
        %v761 = vpop.f32.mrb[0].mxu0
        %v762 = vpop.f32.mrb[0].mxu0
        %v763 = vpop.f32.mrb[0].mxu0
        %764 = vdwg.mxu0
        %v765 = vrcp.pop %v716
        %v766 = vmul.f32 %v760, %v765
        %v767 = vpack.c.bf16 %v766, %v766
        %s768 = smul.addr %s32, 4
        %s769 = scalar_lea.vmem %s9, %s768
        %v770 = vld [vmem:[%s769] sm:$0xf]
        %v772 = vsel %vm661, %v767, 0
        %v775 = vsel %vm721, %v770, 0
        %777 = vmatprep.subr.bf16.mxu0 0
        %778 = vmatpush1.bf16.msra.mxu0 %v775
        %779 = vmatprep.subr.bf16.mxu0 0
        %780 = vmatpush1.bf16.msra.mxu0 0
        %781 = vmatprep.subr.bf16.mxu0 0
        %782 = vmatpush1.bf16.msra.mxu0 0
        %783 = vmatprep.subr.bf16.mxu0 0
        %784 = vmatpush1.bf16.msra.mxu0 0
        %785 = vmatprep.subr.bf16.mxu0 0
        %786 = vmatpush1.bf16.msra.mxu0 0
        %787 = vmatprep.subr.bf16.mxu0 0
        %788 = vmatpush1.bf16.msra.mxu0 0
        %789 = vmatprep.subr.bf16.mxu0 0
        %790 = vmatpush1.bf16.msra.mxu0 0
        %791 = vmatprep.subr.bf16.mxu0 0
        %792 = vmatpush1.bf16.msra.mxu0 0
        %793 = vmatprep.subr.bf16.mxu0 0
        %794 = vmatpush1.bf16.msra.mxu0 0
        %795 = vmatprep.subr.bf16.mxu0 0
        %796 = vmatpush1.bf16.msra.mxu0 0
        %797 = vmatprep.subr.bf16.mxu0 0
        %798 = vmatpush1.bf16.msra.mxu0 0
        %799 = vmatprep.subr.bf16.mxu0 0
        %800 = vmatpush1.bf16.msra.mxu0 0
        %801 = vmatprep.subr.bf16.mxu0 0
        %802 = vmatpush1.bf16.msra.mxu0 0
        %803 = vmatprep.subr.bf16.mxu0 0
        %804 = vmatpush1.bf16.msra.mxu0 0
        %805 = vmatprep.subr.bf16.mxu0 0
        %806 = vmatpush1.bf16.msra.mxu0 0
        %807 = vmatprep.subr.bf16.mxu0 0
        %808 = vmatpush1.bf16.msra.mxu0 0
        %809 = vmatprep.mubr.bf16.mxu0 0
        %810 = vmatmul.mubr.bf16.gmra.mrb[0].mxu0 %v772
        %v811 = vpop.f32.mrb[0].mxu0
        %v812 = vadd.f32 0.0, %v811
        %v813 = vpop.f32.mrb[0].mxu0
        %v814 = vpop.f32.mrb[0].mxu0
        %v815 = vpop.f32.mrb[0].mxu0
        %816 = vdwg.mxu0
        %p817 = scmp.eq.s32.totalorder %s32, 0
        // Predicated region
        $region65: #{tpu_custom_call.1} parent=63 // pred_check
          %p818 = pneg %p817
        $region66: #{tpu_custom_call.1} parent=63 // pred_check_branch
          %820 = sbr.rel (%p818) target = $region68
        $region67: #{tpu_custom_call.1} parent=63 // pred_region
          %821 = vst.msk [vmem:[#allocation2] sm:$0xff] %vm476, 0.0
        $region68: #{tpu_custom_call.1} parent=63 // pred_fallthru
          _
        %v822 = vld [vmem:[#allocation2] sm:$0xff]
        %v823 = vadd.f32 %v822, %v812
        %824 = vst.msk [vmem:[#allocation2] sm:$0xff] %vm476, %v823
        %p825 = scmp.eq.s32.totalorder %s32, 3
        // Predicated region
        $region69: #{tpu_custom_call.1} parent=63 // pred_check
          %p826 = pneg %p825
        $region70: #{tpu_custom_call.1} parent=63 // pred_check_branch
          %828 = sbr.rel (%p826) target = $region72
        $region71: #{tpu_custom_call.1} parent=63 // pred_region
          %v829 = vld [vmem:[#allocation2] sm:$0xff]
          %v830 = vld [vmem:[%s10] sm:$0x1]
          %v832 = vlaneseq
          %v833 = vshrl.u32 %v832, 7
          %v834 = vsub.s32 0, %v833
          %v835 = vrot.slane %v830, %v834
          %v837 = vadd.f32 %v829, %v835
          %838 = vst.msk [vmem:[%s432] sm:$0xff] %vm476, %v837
        $region72: #{tpu_custom_call.1} parent=63 // pred_fallthru
          _
        %s839 = sand.u32 %s302, 1
        %s840 = scalar_lea.sflag [#allocation4], %s839
        %s841 = sand.u32 %s302, 1
        %s842 = smul.addr %s841, 8
        %s843 = scalar_lea.vmem [#allocation3], %s842
        // Predicated region
        $region73: #{tpu_custom_call.1} parent=63 // pred_check
          %p844 = pneg %p312
        $region74: #{tpu_custom_call.1} parent=63 // pred_check_branch
          %846 = sbr.rel (%p844) target = $region76
        $region75: #{tpu_custom_call.1} parent=63 // pred_region
          %s848 = ssub.s32 128, 128
          %849 = vsyncadd %s840, %s848
          %s850 = sadd.s32 %s31, %s30
          %s851 = smul.addr %s850, 128
          %s852 = scalar_lea.hbm %s11, %s851
          %s854 = sshll.u32 %s843, 4
          %s855 = int_to_ptr.vmem [resolvable:$true] %s854
          %857 = dma.vmem_to_hbm [thread:$0]  %s855, 128, %s852, %s840
        $region76: #{tpu_custom_call.1} parent=63 // pred_fallthru
          _
      $region64: #{tpu_custom_call.1} parent=5 // pred_fallthru
        _
      %p858 = scmp.le.s32.totalorder 2, %s20
      // Predicated region
      $region77: #{tpu_custom_call.1} parent=5 // pred_check
        %p859 = pneg %p858
      $region78: #{tpu_custom_call.1} parent=5 // pred_check_branch
        %861 = sbr.rel (%p859) target = $region80
      $region79: #{tpu_custom_call.1} parent=5 // pred_region
        %s862 = ssub.s32 %s20, 2
        // Predicated region
        $region81: #{tpu_custom_call.1} parent=79 // pred_check
          %p863 = pneg %p318
        $region82: #{tpu_custom_call.1} parent=79 // pred_check_branch
          %865 = sbr.rel (%p863) target = $region84
        $region83: #{tpu_custom_call.1} parent=79 // pred_region
          %s866 = sand.u32 %s303, 1
          %s867 = scalar_lea.sflag [#allocation4], %s866
          %s868 = sand.u32 %s303, 1
          %s869 = smul.addr %s868, 8
          %s870 = scalar_lea.vmem [#allocation3], %s869
          %871 = dma.done %s867, 128
        $region84: #{tpu_custom_call.1} parent=79 // pred_fallthru
          _
      $region80: #{tpu_custom_call.1} parent=5 // pred_fallthru
        _
    $region6: #{tpu_custom_call.1} parent=1 // loop_footer
      %s24 = sadd.s32 1, %s20
    $region7: #{tpu_custom_call.1} parent=1 // loop_footer_branch
      %19 = sbr.rel target = $region3
    $region8: #{tpu_custom_call.1} parent=1 // loop_exit
      _
    %872 = vsyncpa [#allocation4], 1
    %s873 = scalar_lea.sflag [#allocation4], 1
    %874 = vsyncpa %s873, 1

</llo_original>
